<compile_context>
chip_gen: v7x
topology: tpu7x:2x2x1
jax: 0.10.0
libtpu: 0.0.40
codegen_flags: <defaults>
</compile_context>

<pallas_src>
import functools

import jax
import jax.numpy as jnp
from jax.experimental import pallas as pl
from jax.experimental.pallas import tpu as pltpu

HIDDEN = 256


def _round_up(x, m):
    return ((x + m - 1) // m) * m


def _choose_tb(B):
    """Batch tile: >= 2 tiles when feasible (v7x megacore), capped at 1024 rows."""
    if B < 64:
        return _round_up(B, 8)            # tiny/latency batch: single tile
    if B <= 2048:
        return _round_up((B + 1) // 2, 8)  # exactly 2 tiles -> both TCs busy
    return 1024                            # large batch: 1024-row tiles


def actor_kernel(state_ref,
                 w1_ref, b1_ref,
                 w2_ref, b2_ref,
                 w3_ref, b3_ref,
                 w4_ref, b4_ref,
                 w6_ref, b6_ref,
                 pw_ref,
                 out_ref,
                 *, max_action):
    # bf16 operands on the MXU, f32 accumulation; bias add + PReLU in f32.
    def layer(x_bf16, w_ref, b_ref, slope):
        a = jnp.dot(x_bf16, w_ref[...],
                    preferred_element_type=jnp.float32) + b_ref[...]
        return jnp.where(a >= 0.0, a, slope * a)

    x = state_ref[...].astype(jnp.bfloat16)          # K = state_dim (no pad)
    a = layer(x, w1_ref, b1_ref, pw_ref[0])
    a = layer(a.astype(jnp.bfloat16), w2_ref, b2_ref, pw_ref[1])
    a = layer(a.astype(jnp.bfloat16), w3_ref, b3_ref, pw_ref[2])
    a = layer(a.astype(jnp.bfloat16), w4_ref, b4_ref, pw_ref[3])

    out = jnp.dot(a.astype(jnp.bfloat16), w6_ref[...],
                  preferred_element_type=jnp.float32) + b6_ref[...]
    out_ref[...] = (max_action * jnp.tanh(out)).astype(out_ref.dtype)


def prepare_params(params):
    """One-time weight preprocessing (NOT per forward): cast weights to bf16."""
    prepped = dict(params)
    for name in ("w1", "w2", "w3", "w4", "w6"):
        prepped[name] = params[name].astype(jnp.bfloat16)
    for name in ("b1", "b2", "b3", "b4", "b6"):
        prepped[name] = params[name].astype(jnp.float32)
    return prepped


def actor_forward(state, prepped, prelu_weights, max_action):
    """state: (B, state_dim) f32.  prepped: output of prepare_params (bf16 weights)."""
    B, state_dim = state.shape
    action_dim = prepped["w6"].shape[1]

    tb = _choose_tb(B)
    grid = (pl.cdiv(B, tb),)

    def batch_map(i):
        return (i, 0)

    def const_map(i):
        return (0, 0)

    in_specs = [
        pl.BlockSpec((tb, state_dim), batch_map),            # state tile (per step)
        pl.BlockSpec((state_dim, HIDDEN), const_map),        # w1 (resident, bf16)
        pl.BlockSpec((1, HIDDEN), const_map),                # b1
        pl.BlockSpec((HIDDEN, HIDDEN), const_map),           # w2
        pl.BlockSpec((1, HIDDEN), const_map),                # b2
        pl.BlockSpec((HIDDEN, HIDDEN), const_map),           # w3
        pl.BlockSpec((1, HIDDEN), const_map),                # b3
        pl.BlockSpec((HIDDEN, HIDDEN), const_map),           # w4
        pl.BlockSpec((1, HIDDEN), const_map),                # b4
        pl.BlockSpec((HIDDEN, action_dim), const_map),       # w6 (unpadded N)
        pl.BlockSpec((1, action_dim), const_map),            # b6
        pl.BlockSpec(memory_space=pltpu.MemorySpace.SMEM),   # PReLU slopes
    ]
    out_specs = pl.BlockSpec((tb, action_dim), batch_map)    # unpadded output

    return pl.pallas_call(
        functools.partial(actor_kernel, max_action=float(max_action)),
        out_shape=jax.ShapeDtypeStruct((B, action_dim), jnp.float32),
        grid=grid,
        in_specs=in_specs,
        out_specs=out_specs,
        compiler_params=pltpu.CompilerParams(
            dimension_semantics=("parallel",)),
    )(state,
      prepped["w1"], prepped["b1"], prepped["w2"], prepped["b2"],
      prepped["w3"], prepped["b3"], prepped["w4"], prepped["b4"],
      prepped["w6"], prepped["b6"], prelu_weights)


def init_params(key, state_dim, action_dim):
    """Deterministic init mimicking nn.Linear's U(-1/sqrt(fan_in), 1/sqrt(fan_in))."""
    def linear(k, fan_in, fan_out):
        kw, kb = jax.random.split(k)
        bound = 1.0 / jnp.sqrt(jnp.float32(fan_in))
        w = jax.random.uniform(kw, (fan_in, fan_out), jnp.float32, -bound, bound)
        b = jax.random.uniform(kb, (1, fan_out), jnp.float32, -bound, bound)
        return w, b

    keys = jax.random.split(key, 5)
    params = {}
    params["w1"], params["b1"] = linear(keys[0], state_dim, HIDDEN)
    params["w2"], params["b2"] = linear(keys[1], HIDDEN, HIDDEN)
    params["w3"], params["b3"] = linear(keys[2], HIDDEN, HIDDEN)
    params["w4"], params["b4"] = linear(keys[3], HIDDEN, HIDDEN)
    params["w6"], params["b6"] = linear(keys[4], HIDDEN, action_dim)
    return params


def reference_forward(state, params, prelu_weights, max_action):
    """Pure-JAX reference using the same mixed precision (bf16 operands, f32 acc)."""
    def mm(a, w):
        return jnp.dot(a.astype(jnp.bfloat16), w.astype(jnp.bfloat16),
                       preferred_element_type=jnp.float32)

    a = state
    for i, name in enumerate(["1", "2", "3", "4"]):
        a = mm(a, params["w" + name]) + params["b" + name]
        a = jnp.where(a >= 0, a, prelu_weights[i] * a)
    out = mm(a, params["w6"]) + params["b6"]
    return max_action * jnp.tanh(out)


if __name__ == "__main__":
    state_dim = 16
    action_dim = 4
    max_action = 2.0

    key = jax.random.PRNGKey(0)
    k_state, k_params, k_prelu, k_state2 = jax.random.split(key, 4)

    params = init_params(k_params, state_dim, action_dim)
    prepped = prepare_params(params)          # one-time weight prep (bf16 cast)
    # TODO(synk): PyTorch samples torch.randn(1) per PReLU on every forward;
    # here the 4 slopes are sampled once deterministically and passed in.
    prelu_weights = jax.random.normal(k_prelu, (4,), jnp.float32)

    # Small latency-style batch and a larger non-tile-aligned batch
    # (exercises the partial last tile / multi-step parallel grid path).
    for batch, ks in ((8, k_state), (200, k_state2)):
        state = jax.random.normal(ks, (batch, state_dim), jnp.float32)
        out = jax.block_until_ready(
            actor_forward(state, prepped, prelu_weights, max_action))
        ref = reference_forward(state, params, prelu_weights, max_action)
        assert out.shape == (batch, action_dim)
        err = float(jnp.max(jnp.abs(out - ref)))
        assert jnp.allclose(out, ref, atol=1e-2, rtol=1e-2), \
            f"B={batch}: max abs err {err}"

    print("KERNEL_OK")
</pallas_src>

<mosaic_0001>
module attributes {stable_mosaic.version = 11 : i64} {
  func.func @actor_kernel(%arg0: i32, %arg1: memref<8x16xf32, #tpu.memory_space<vmem>>, %arg2: memref<16x256xbf16, #tpu.memory_space<vmem>>, %arg3: memref<1x256xf32, #tpu.memory_space<vmem>>, %arg4: memref<256x256xbf16, #tpu.memory_space<vmem>>, %arg5: memref<1x256xf32, #tpu.memory_space<vmem>>, %arg6: memref<256x256xbf16, #tpu.memory_space<vmem>>, %arg7: memref<1x256xf32, #tpu.memory_space<vmem>>, %arg8: memref<256x256xbf16, #tpu.memory_space<vmem>>, %arg9: memref<1x256xf32, #tpu.memory_space<vmem>>, %arg10: memref<256x4xbf16, #tpu.memory_space<vmem>>, %arg11: memref<1x4xf32, #tpu.memory_space<vmem>>, %arg12: memref<4xf32, #tpu.memory_space<smem>>, %arg13: memref<8x4xf32, #tpu.memory_space<vmem>>) attributes {dimension_semantics = [#tpu.dimension_semantics<parallel>], iteration_bounds = array<i64: 1>, scalar_prefetch = 0 : i64, scratch_operands = 0 : i64, tpu.core_type = #tpu.core_type<tc>, window_params = [{transform_indices = @transform_0, window_bounds = array<i64: 8, 16>}, {pipeline_mode = #tpu.pipeline_mode<synchronous>, transform_indices = @transform_1, window_bounds = array<i64: 16, 256>}, {pipeline_mode = #tpu.pipeline_mode<synchronous>, transform_indices = @transform_2, window_bounds = array<i64: 1, 256>}, {pipeline_mode = #tpu.pipeline_mode<synchronous>, transform_indices = @transform_3, window_bounds = array<i64: 256, 256>}, {pipeline_mode = #tpu.pipeline_mode<synchronous>, transform_indices = @transform_4, window_bounds = array<i64: 1, 256>}, {pipeline_mode = #tpu.pipeline_mode<synchronous>, transform_indices = @transform_5, window_bounds = array<i64: 256, 256>}, {pipeline_mode = #tpu.pipeline_mode<synchronous>, transform_indices = @transform_6, window_bounds = array<i64: 1, 256>}, {pipeline_mode = #tpu.pipeline_mode<synchronous>, transform_indices = @transform_7, window_bounds = array<i64: 256, 256>}, {pipeline_mode = #tpu.pipeline_mode<synchronous>, transform_indices = @transform_8, window_bounds = array<i64: 1, 256>}, {pipeline_mode = #tpu.pipeline_mode<synchronous>, transform_indices = @transform_9, window_bounds = array<i64: 256, 4>}, {pipeline_mode = #tpu.pipeline_mode<synchronous>, transform_indices = @transform_10, window_bounds = array<i64: 1, 4>}, {transform_indices = @transform_11, window_bounds = array<i64: 4>}, {transform_indices = @transform_12, window_bounds = array<i64: 8, 4>}]} {
    %c0 = arith.constant 0 : index
    %c0_0 = arith.constant 0 : index
    %0 = vector.load %arg1[%c0, %c0_0] : memref<8x16xf32, #tpu.memory_space<vmem>>, vector<8x16xf32>
    %1 = arith.truncf %0 : vector<8x16xf32> to vector<8x16xbf16>
    %c0_1 = arith.constant 0 : index
    %2 = memref.load %arg12[%c0_1] : memref<4xf32, #tpu.memory_space<smem>>
    %c0_2 = arith.constant 0 : index
    %c0_3 = arith.constant 0 : index
    %3 = vector.load %arg2[%c0_2, %c0_3] : memref<16x256xbf16, #tpu.memory_space<vmem>>, vector<16x256xbf16>
    %cst = arith.constant dense<0.000000e+00> : vector<8x256xf32>
    %4 = tpu.matmul %1, %3, %cst {dimension_numbers = #tpu.dot_dimension_numbers<[1], [0], [0], [1], [0, 0, 1, 1], [], []>} : vector<8x16xbf16>, vector<16x256xbf16>, vector<8x256xf32> -> vector<8x256xf32>
    %c0_4 = arith.constant 0 : index
    %c0_5 = arith.constant 0 : index
    %5 = vector.load %arg3[%c0_4, %c0_5] : memref<1x256xf32, #tpu.memory_space<vmem>>, vector<1x256xf32>
    %6 = vector.broadcast %5 : vector<1x256xf32> to vector<8x256xf32>
    %7 = arith.addf %4, %6 : vector<8x256xf32>
    %cst_6 = arith.constant 0.000000e+00 : f32
    %8 = vector.broadcast %cst_6 : f32 to vector<8x256xf32>
    %9 = arith.cmpf oge, %7, %8 : vector<8x256xf32>
    %10 = vector.broadcast %2 : f32 to vector<8x256xf32>
    %11 = arith.mulf %10, %7 : vector<8x256xf32>
    %12 = arith.select %9, %7, %11 : vector<8x256xi1>, vector<8x256xf32>
    %13 = arith.truncf %12 : vector<8x256xf32> to vector<8x256xbf16>
    %c1 = arith.constant 1 : index
    %14 = memref.load %arg12[%c1] : memref<4xf32, #tpu.memory_space<smem>>
    %c0_7 = arith.constant 0 : index
    %c0_8 = arith.constant 0 : index
    %15 = vector.load %arg4[%c0_7, %c0_8] : memref<256x256xbf16, #tpu.memory_space<vmem>>, vector<256x256xbf16>
    %cst_9 = arith.constant dense<0.000000e+00> : vector<8x256xf32>
    %16 = tpu.matmul %13, %15, %cst_9 {dimension_numbers = #tpu.dot_dimension_numbers<[1], [0], [0], [1], [0, 0, 1, 1], [], []>} : vector<8x256xbf16>, vector<256x256xbf16>, vector<8x256xf32> -> vector<8x256xf32>
    %c0_10 = arith.constant 0 : index
    %c0_11 = arith.constant 0 : index
    %17 = vector.load %arg5[%c0_10, %c0_11] : memref<1x256xf32, #tpu.memory_space<vmem>>, vector<1x256xf32>
    %18 = vector.broadcast %17 : vector<1x256xf32> to vector<8x256xf32>
    %19 = arith.addf %16, %18 : vector<8x256xf32>
    %cst_12 = arith.constant 0.000000e+00 : f32
    %20 = vector.broadcast %cst_12 : f32 to vector<8x256xf32>
    %21 = arith.cmpf oge, %19, %20 : vector<8x256xf32>
    %22 = vector.broadcast %14 : f32 to vector<8x256xf32>
    %23 = arith.mulf %22, %19 : vector<8x256xf32>
    %24 = arith.select %21, %19, %23 : vector<8x256xi1>, vector<8x256xf32>
    %25 = arith.truncf %24 : vector<8x256xf32> to vector<8x256xbf16>
    %c2 = arith.constant 2 : index
    %26 = memref.load %arg12[%c2] : memref<4xf32, #tpu.memory_space<smem>>
    %c0_13 = arith.constant 0 : index
    %c0_14 = arith.constant 0 : index
    %27 = vector.load %arg6[%c0_13, %c0_14] : memref<256x256xbf16, #tpu.memory_space<vmem>>, vector<256x256xbf16>
    %cst_15 = arith.constant dense<0.000000e+00> : vector<8x256xf32>
    %28 = tpu.matmul %25, %27, %cst_15 {dimension_numbers = #tpu.dot_dimension_numbers<[1], [0], [0], [1], [0, 0, 1, 1], [], []>} : vector<8x256xbf16>, vector<256x256xbf16>, vector<8x256xf32> -> vector<8x256xf32>
    %c0_16 = arith.constant 0 : index
    %c0_17 = arith.constant 0 : index
    %29 = vector.load %arg7[%c0_16, %c0_17] : memref<1x256xf32, #tpu.memory_space<vmem>>, vector<1x256xf32>
    %30 = vector.broadcast %29 : vector<1x256xf32> to vector<8x256xf32>
    %31 = arith.addf %28, %30 : vector<8x256xf32>
    %cst_18 = arith.constant 0.000000e+00 : f32
    %32 = vector.broadcast %cst_18 : f32 to vector<8x256xf32>
    %33 = arith.cmpf oge, %31, %32 : vector<8x256xf32>
    %34 = vector.broadcast %26 : f32 to vector<8x256xf32>
    %35 = arith.mulf %34, %31 : vector<8x256xf32>
    %36 = arith.select %33, %31, %35 : vector<8x256xi1>, vector<8x256xf32>
    %37 = arith.truncf %36 : vector<8x256xf32> to vector<8x256xbf16>
    %c3 = arith.constant 3 : index
    %38 = memref.load %arg12[%c3] : memref<4xf32, #tpu.memory_space<smem>>
    %c0_19 = arith.constant 0 : index
    %c0_20 = arith.constant 0 : index
    %39 = vector.load %arg8[%c0_19, %c0_20] : memref<256x256xbf16, #tpu.memory_space<vmem>>, vector<256x256xbf16>
    %cst_21 = arith.constant dense<0.000000e+00> : vector<8x256xf32>
    %40 = tpu.matmul %37, %39, %cst_21 {dimension_numbers = #tpu.dot_dimension_numbers<[1], [0], [0], [1], [0, 0, 1, 1], [], []>} : vector<8x256xbf16>, vector<256x256xbf16>, vector<8x256xf32> -> vector<8x256xf32>
    %c0_22 = arith.constant 0 : index
    %c0_23 = arith.constant 0 : index
    %41 = vector.load %arg9[%c0_22, %c0_23] : memref<1x256xf32, #tpu.memory_space<vmem>>, vector<1x256xf32>
    %42 = vector.broadcast %41 : vector<1x256xf32> to vector<8x256xf32>
    %43 = arith.addf %40, %42 : vector<8x256xf32>
    %cst_24 = arith.constant 0.000000e+00 : f32
    %44 = vector.broadcast %cst_24 : f32 to vector<8x256xf32>
    %45 = arith.cmpf oge, %43, %44 : vector<8x256xf32>
    %46 = vector.broadcast %38 : f32 to vector<8x256xf32>
    %47 = arith.mulf %46, %43 : vector<8x256xf32>
    %48 = arith.select %45, %43, %47 : vector<8x256xi1>, vector<8x256xf32>
    %49 = arith.truncf %48 : vector<8x256xf32> to vector<8x256xbf16>
    %c0_25 = arith.constant 0 : index
    %c0_26 = arith.constant 0 : index
    %50 = vector.load %arg10[%c0_25, %c0_26] : memref<256x4xbf16, #tpu.memory_space<vmem>>, vector<256x4xbf16>
    %cst_27 = arith.constant dense<0.000000e+00> : vector<8x4xf32>
    %51 = tpu.matmul %49, %50, %cst_27 {dimension_numbers = #tpu.dot_dimension_numbers<[1], [0], [0], [1], [0, 0, 1, 1], [], []>} : vector<8x256xbf16>, vector<256x4xbf16>, vector<8x4xf32> -> vector<8x4xf32>
    %c0_28 = arith.constant 0 : index
    %c0_29 = arith.constant 0 : index
    %52 = vector.load %arg11[%c0_28, %c0_29] : memref<1x4xf32, #tpu.memory_space<vmem>>, vector<1x4xf32>
    %53 = vector.broadcast %52 : vector<1x4xf32> to vector<8x4xf32>
    %54 = arith.addf %51, %53 : vector<8x4xf32>
    %55 = math.tanh %54 : vector<8x4xf32>
    %cst_30 = arith.constant 2.000000e+00 : f32
    %56 = vector.broadcast %cst_30 : f32 to vector<8x4xf32>
    %57 = arith.mulf %56, %55 : vector<8x4xf32>
    %c0_31 = arith.constant 0 : index
    %c0_32 = arith.constant 0 : index
    %58 = vector.load %arg13[%c0_31, %c0_32] : memref<8x4xf32, #tpu.memory_space<vmem>>, vector<8x4xf32>
    tpu.vector_store %arg13[%c0_31, %c0_32], %57 {strides = array<i32>} : memref<8x4xf32, #tpu.memory_space<vmem>>, vector<8x4xf32>,
    return
  }
  func.func @transform_0(%arg0: i32) -> (i32, i32) {
    %c0_i32 = arith.constant 0 : i32
    %c0_i32_0 = arith.constant 0 : i32
    return %arg0, %c0_i32 : i32, i32
  }
  func.func @transform_1(%arg0: i32) -> (i32, i32) {
    %c0_i32 = arith.constant 0 : i32
    %c0_i32_0 = arith.constant 0 : i32
    %c0_i32_1 = arith.constant 0 : i32
    return %c0_i32, %c0_i32_0 : i32, i32
  }
  func.func @transform_2(%arg0: i32) -> (i32, i32) {
    %c0_i32 = arith.constant 0 : i32
    %c0_i32_0 = arith.constant 0 : i32
    %c0_i32_1 = arith.constant 0 : i32
    return %c0_i32, %c0_i32_0 : i32, i32
  }
  func.func @transform_3(%arg0: i32) -> (i32, i32) {
    %c0_i32 = arith.constant 0 : i32
    %c0_i32_0 = arith.constant 0 : i32
    %c0_i32_1 = arith.constant 0 : i32
    return %c0_i32, %c0_i32_0 : i32, i32
  }
  func.func @transform_4(%arg0: i32) -> (i32, i32) {
    %c0_i32 = arith.constant 0 : i32
    %c0_i32_0 = arith.constant 0 : i32
    %c0_i32_1 = arith.constant 0 : i32
    return %c0_i32, %c0_i32_0 : i32, i32
  }
  func.func @transform_5(%arg0: i32) -> (i32, i32) {
    %c0_i32 = arith.constant 0 : i32
    %c0_i32_0 = arith.constant 0 : i32
    %c0_i32_1 = arith.constant 0 : i32
    return %c0_i32, %c0_i32_0 : i32, i32
  }
  func.func @transform_6(%arg0: i32) -> (i32, i32) {
    %c0_i32 = arith.constant 0 : i32
    %c0_i32_0 = arith.constant 0 : i32
    %c0_i32_1 = arith.constant 0 : i32
    return %c0_i32, %c0_i32_0 : i32, i32
  }
  func.func @transform_7(%arg0: i32) -> (i32, i32) {
    %c0_i32 = arith.constant 0 : i32
    %c0_i32_0 = arith.constant 0 : i32
    %c0_i32_1 = arith.constant 0 : i32
    return %c0_i32, %c0_i32_0 : i32, i32
  }
  func.func @transform_8(%arg0: i32) -> (i32, i32) {
    %c0_i32 = arith.constant 0 : i32
    %c0_i32_0 = arith.constant 0 : i32
    %c0_i32_1 = arith.constant 0 : i32
    return %c0_i32, %c0_i32_0 : i32, i32
  }
  func.func @transform_9(%arg0: i32) -> (i32, i32) {
    %c0_i32 = arith.constant 0 : i32
    %c0_i32_0 = arith.constant 0 : i32
    %c0_i32_1 = arith.constant 0 : i32
    return %c0_i32, %c0_i32_0 : i32, i32
  }
  func.func @transform_10(%arg0: i32) -> (i32, i32) {
    %c0_i32 = arith.constant 0 : i32
    %c0_i32_0 = arith.constant 0 : i32
    %c0_i32_1 = arith.constant 0 : i32
    return %c0_i32, %c0_i32_0 : i32, i32
  }
  func.func @transform_11(%arg0: i32) -> i32 {
    %c0_i32 = arith.constant 0 : i32
    %c0_i32_0 = arith.constant 0 : i32
    return %c0_i32 : i32
  }
  func.func @transform_12(%arg0: i32) -> (i32, i32) {
    %c0_i32 = arith.constant 0 : i32
    %c0_i32_0 = arith.constant 0 : i32
    return %arg0, %c0_i32 : i32, i32
  }
}

</mosaic_0001>

<llo_original>
// kernel: tpu_custom_call.1
$region0: #{tpu_custom_call.1}
  #allocation0 [shape = 'u32[]', space=smem, size = 0x4, offset = 0x4, fixed_abs, tag = 'smem constant byte address 0x4 - core index']
  #allocation1 [shape = 'u32[144,128]{1,0:T(1,128)}', space=vmem, size = 0x12000, scoped, tag = 'internal scratch']
  %s0 = inlined_call_operand.vmem [shape: f32[8,16], index: 0, kind: input, shape index: {}]
  %s1 = inlined_call_operand.vmem [shape: bf16[16,256], index: 1, kind: input, shape index: {}]
  %s2 = inlined_call_operand.vmem [shape: f32[1,256], index: 2, kind: input, shape index: {}]
  %s3 = inlined_call_operand.hbm [shape: bf16[256,256], index: 3, kind: input, shape index: {}]
  %s4 = inlined_call_operand.vmem [shape: f32[1,256], index: 4, kind: input, shape index: {}]
  %s5 = inlined_call_operand.hbm [shape: bf16[256,256], index: 5, kind: input, shape index: {}]
  %s6 = inlined_call_operand.vmem [shape: f32[1,256], index: 6, kind: input, shape index: {}]
  %s7 = inlined_call_operand.hbm [shape: bf16[256,256], index: 7, kind: input, shape index: {}]
  %s8 = inlined_call_operand.vmem [shape: f32[1,256], index: 8, kind: input, shape index: {}]
  %s9 = inlined_call_operand.vmem [shape: bf16[256,4], index: 9, kind: input, shape index: {}]
  %s10 = inlined_call_operand.vmem [shape: f32[1,4], index: 10, kind: input, shape index: {}]
  %s11 = inlined_call_operand.vmem [shape: f32[4], index: 11, kind: input, shape index: {}]
  %s12 = inlined_call_operand.vmem [shape: f32[8,4], index: 12, kind: output, shape index: {}]
  %s13 = sld [smem:[#allocation0]]
  $region74: #{tpu_custom_call.1} parent=0
    _
  %s15 = ssub.s32 1, %s13
  %s16 = scalar_select 0, %s15, %s13
  $region1: #{tpu_custom_call.1} parent=0
    #allocation2 [shape = 'u8[131072]{0}', space=vmem, size = 0x20000, scoped, tag = 'input window, operand 3, single buffered']
    #allocation3 [shape = 's32[1]{0}', space=sflag, size = 0x4, scoped, tag = 'scoped memory for tpu_custom_call.1']
    #allocation4 [shape = 's32[1]{0}', space=sflag, size = 0x4, scoped, tag = 'scoped memory for tpu_custom_call.1']
    #allocation5 [shape = 'u8[131072]{0}', space=vmem, size = 0x20000, scoped, tag = 'input window, operand 5, single buffered']
    #allocation6 [shape = 's32[1]{0}', space=sflag, size = 0x4, scoped, tag = 'scoped memory for tpu_custom_call.1']
    #allocation7 [shape = 'u8[131072]{0}', space=vmem, size = 0x20000, scoped, tag = 'input window, operand 7, single buffered']
    #allocation8 [shape = 'u8[512]{0}', space=smem, size = 0x200, scoped, tag = 'input window, operand 11, single buffered']
    %17 = vsyncpa [#allocation3], 0
    %18 = vsyncpa [#allocation6], 0
    %19 = vsyncpa [#allocation4], 0
    // Predicated region
    $region2: #{tpu_custom_call.1} parent=1 // pred_check
      _
    $region3: #{tpu_custom_call.1} parent=1 // pred_check_branch
      %21 = sbr.rel (0) target = $region5
    $region4: #{tpu_custom_call.1} parent=1 // pred_region
      _
    $region5: #{tpu_custom_call.1} parent=1 // pred_fallthru
      _
    // Predicated region
    $region6: #{tpu_custom_call.1} parent=1 // pred_check
      _
    $region7: #{tpu_custom_call.1} parent=1 // pred_check_branch
      %23 = sbr.rel (0) target = $region9
    $region8: #{tpu_custom_call.1} parent=1 // pred_region
      _
    $region9: #{tpu_custom_call.1} parent=1 // pred_fallthru
      _
    // Predicated region
    $region10: #{tpu_custom_call.1} parent=1 // pred_check
      _
    $region11: #{tpu_custom_call.1} parent=1 // pred_check_branch
      %25 = sbr.rel (0) target = $region13
    $region12: #{tpu_custom_call.1} parent=1 // pred_region
      _
    $region13: #{tpu_custom_call.1} parent=1 // pred_fallthru
      _
    // Predicated region
    $region14: #{tpu_custom_call.1} parent=1 // pred_check
      _
    $region15: #{tpu_custom_call.1} parent=1 // pred_check_branch
      %27 = sbr.rel (0) target = $region17
    $region16: #{tpu_custom_call.1} parent=1 // pred_region
      %s29 = ssub.s32 4096, 4096
      %30 = vsyncadd [#allocation3], %s29
      %s31 = sshll.u32 [#allocation2], 4
      %s32 = int_to_ptr.vmem [resolvable:$true] %s31
      %37 = dma.hbm_to_vmem [thread:$0]  %s3, 4096, %s32, [#allocation3], 128, 128, 8
    $region17: #{tpu_custom_call.1} parent=1 // pred_fallthru
      _
    // Predicated region
    $region18: #{tpu_custom_call.1} parent=1 // pred_check
      _
    $region19: #{tpu_custom_call.1} parent=1 // pred_check_branch
      %39 = sbr.rel (0) target = $region21
    $region20: #{tpu_custom_call.1} parent=1 // pred_region
      _
    $region21: #{tpu_custom_call.1} parent=1 // pred_fallthru
      _
    // Predicated region
    $region22: #{tpu_custom_call.1} parent=1 // pred_check
      _
    $region23: #{tpu_custom_call.1} parent=1 // pred_check_branch
      %41 = sbr.rel (0) target = $region25
    $region24: #{tpu_custom_call.1} parent=1 // pred_region
      %s43 = ssub.s32 4096, 4096
      %44 = vsyncadd [#allocation6], %s43
      %s45 = sshll.u32 [#allocation5], 4
      %s46 = int_to_ptr.vmem [resolvable:$true] %s45
      %51 = dma.hbm_to_vmem [thread:$0]  %s5, 4096, %s46, [#allocation6], 128, 128, 8
    $region25: #{tpu_custom_call.1} parent=1 // pred_fallthru
      _
    // Predicated region
    $region26: #{tpu_custom_call.1} parent=1 // pred_check
      _
    $region27: #{tpu_custom_call.1} parent=1 // pred_check_branch
      %53 = sbr.rel (0) target = $region29
    $region28: #{tpu_custom_call.1} parent=1 // pred_region
      _
    $region29: #{tpu_custom_call.1} parent=1 // pred_fallthru
      _
    // Predicated region
    $region30: #{tpu_custom_call.1} parent=1 // pred_check
      _
    $region31: #{tpu_custom_call.1} parent=1 // pred_check_branch
      %55 = sbr.rel (0) target = $region33
    $region32: #{tpu_custom_call.1} parent=1 // pred_region
      %s57 = ssub.s32 4096, 4096
      %58 = vsyncadd [#allocation6], %s57
      %s59 = sshll.u32 [#allocation7], 4
      %s60 = int_to_ptr.vmem [resolvable:$true] %s59
      %65 = dma.hbm_to_vmem [thread:$0]  %s7, 4096, %s60, [#allocation6], 128, 128, 8
    $region33: #{tpu_custom_call.1} parent=1 // pred_fallthru
      _
    // Predicated region
    $region34: #{tpu_custom_call.1} parent=1 // pred_check
      _
    $region35: #{tpu_custom_call.1} parent=1 // pred_check_branch
      %67 = sbr.rel (0) target = $region37
    $region36: #{tpu_custom_call.1} parent=1 // pred_region
      _
    $region37: #{tpu_custom_call.1} parent=1 // pred_fallthru
      _
    // Predicated region
    $region38: #{tpu_custom_call.1} parent=1 // pred_check
      _
    $region39: #{tpu_custom_call.1} parent=1 // pred_check_branch
      %69 = sbr.rel (0) target = $region41
    $region40: #{tpu_custom_call.1} parent=1 // pred_region
      _
    $region41: #{tpu_custom_call.1} parent=1 // pred_fallthru
      _
    // Predicated region
    $region42: #{tpu_custom_call.1} parent=1 // pred_check
      _
    $region43: #{tpu_custom_call.1} parent=1 // pred_check_branch
      %71 = sbr.rel (0) target = $region45
    $region44: #{tpu_custom_call.1} parent=1 // pred_region
      _
    $region45: #{tpu_custom_call.1} parent=1 // pred_fallthru
      _
    // Predicated region
    $region46: #{tpu_custom_call.1} parent=1 // pred_check
      _
    $region47: #{tpu_custom_call.1} parent=1 // pred_check_branch
      %73 = sbr.rel (0) target = $region49
    $region48: #{tpu_custom_call.1} parent=1 // pred_region
      %s75 = ssub.s32 16, 16
      %76 = vsyncadd [#allocation4], %s75
      %s78 = sshll.u32 %s11, 4
      %s79 = int_to_ptr.vmem [resolvable:$true] %s78
      %81 = dma.vmem_to_smem %s79, 16, [#allocation8], [#allocation4]
    $region49: #{tpu_custom_call.1} parent=1 // pred_fallthru
      _
    // Predicated region
    $region50: #{tpu_custom_call.1} parent=1 // pred_check
      _
    $region51: #{tpu_custom_call.1} parent=1 // pred_check_branch
      %83 = sbr.rel (0) target = $region53
    $region52: #{tpu_custom_call.1} parent=1 // pred_region
      %84 = dma.done [#allocation3], 4096
    $region53: #{tpu_custom_call.1} parent=1 // pred_fallthru
      _
    // Predicated region
    $region54: #{tpu_custom_call.1} parent=1 // pred_check
      _
    $region55: #{tpu_custom_call.1} parent=1 // pred_check_branch
      %86 = sbr.rel (0) target = $region57
    $region56: #{tpu_custom_call.1} parent=1 // pred_region
      %87 = dma.done [#allocation6], 4096
    $region57: #{tpu_custom_call.1} parent=1 // pred_fallthru
      _
    // Predicated region
    $region58: #{tpu_custom_call.1} parent=1 // pred_check
      _
    $region59: #{tpu_custom_call.1} parent=1 // pred_check_branch
      %89 = sbr.rel (0) target = $region61
    $region60: #{tpu_custom_call.1} parent=1 // pred_region
      %90 = dma.done [#allocation6], 4096
    $region61: #{tpu_custom_call.1} parent=1 // pred_fallthru
      _
    // Predicated region
    $region62: #{tpu_custom_call.1} parent=1 // pred_check
      _
    $region63: #{tpu_custom_call.1} parent=1 // pred_check_branch
      %92 = sbr.rel (0) target = $region65
    $region64: #{tpu_custom_call.1} parent=1 // pred_region
      %93 = dma.done [#allocation4], 16
    $region65: #{tpu_custom_call.1} parent=1 // pred_fallthru
      _
    %94 = sfence
    %v96 = vld [vmem:[%s0] sm:$0xff]
    %v97 = vpack.c.bf16 %v96, %v96
    %s98 = sld [smem:[#allocation8]]
    %v99 = vld [vmem:[%s1] sm:$0xff]
    %v100 = vld [vmem:[%s1 + $0x8] sm:$0xff]
    %v101 = vld [vmem:[%s2] sm:$0x3]
    %v103 = vlaneseq
    %v104 = vshrl.u32 %v103, 7
    %v105 = vsub.s32 0, %v104
    %v106 = vrot.slane %v101, %v105
    %v107 = vlaneseq
    %v108 = vshrl.u32 %v107, 7
    %v109 = vsub.s32 1, %v108
    %v110 = vrot.slane %v101, %v109
    %v115 = vunpack.c.l.b16 %v99
    %v116 = vunpack.c.h.b16 %v99
    %v117 = vunpack.c.l.b16 %v100
    %v118 = vunpack.c.h.b16 %v100
    %v119 = vpack.c.b16 %v117, %v115
    %v120 = vpack.c.b16 %v118, %v116
    %vm123 = vcmask 130048
    %v125 = vsel %vm123, %v97, 0
    %127 = vmatprep.subr.bf16.mxu0 %v120
    %128 = vmatpush1.bf16.msra.mxu0 %v119
    %129 = vmatprep.subr.bf16.mxu0 0
    %130 = vmatpush1.bf16.msra.mxu0 0
    %131 = vmatprep.subr.bf16.mxu0 0
    %132 = vmatpush1.bf16.msra.mxu0 0
    %133 = vmatprep.subr.bf16.mxu0 0
    %134 = vmatpush1.bf16.msra.mxu0 0
    %135 = vmatprep.subr.bf16.mxu0 0
    %136 = vmatpush1.bf16.msra.mxu0 0
    %137 = vmatprep.subr.bf16.mxu0 0
    %138 = vmatpush1.bf16.msra.mxu0 0
    %139 = vmatprep.subr.bf16.mxu0 0
    %140 = vmatpush1.bf16.msra.mxu0 0
    %141 = vmatprep.subr.bf16.mxu0 0
    %142 = vmatpush1.bf16.msra.mxu0 0
    %143 = vmatprep.subr.bf16.mxu0 0
    %144 = vmatpush1.bf16.msra.mxu0 0
    %145 = vmatprep.subr.bf16.mxu0 0
    %146 = vmatpush1.bf16.msra.mxu0 0
    %147 = vmatprep.subr.bf16.mxu0 0
    %148 = vmatpush1.bf16.msra.mxu0 0
    %149 = vmatprep.subr.bf16.mxu0 0
    %150 = vmatpush1.bf16.msra.mxu0 0
    %151 = vmatprep.subr.bf16.mxu0 0
    %152 = vmatpush1.bf16.msra.mxu0 0
    %153 = vmatprep.subr.bf16.mxu0 0
    %154 = vmatpush1.bf16.msra.mxu0 0
    %155 = vmatprep.subr.bf16.mxu0 0
    %156 = vmatpush1.bf16.msra.mxu0 0
    %157 = vmatprep.subr.bf16.mxu0 0
    %158 = vmatpush1.bf16.msra.mxu0 0
    %159 = vmatprep.mubr.bf16.mxu0 0
    %160 = vmatmul.mubr.bf16.gmra.mrb[0].mxu0 %v125
    %v161 = vpop.f32.mrb[0].mxu0
    %v162 = vadd.f32 %v106, %v161
    %v163 = vpop.f32.mrb[0].mxu0
    %v164 = vadd.f32 %v110, %v163
    %v165 = vpop.f32.mrb[0].mxu0
    %v166 = vpop.f32.mrb[0].mxu0
    %167 = vdwg.mxu0
    %vm168 = vcmp.ge.f32.partialorder %v162, 0.0
    %vm169 = vcmp.ge.f32.partialorder %v164, 0.0
    %v170 = vstv %s98
    %v171 = vmul.f32 %v170, %v162
    %v172 = vmul.f32 %v170, %v164
    %v173 = vsel %vm168, %v162, %v171
    %v174 = vsel %vm169, %v164, %v172
    %v175 = vpack.c.bf16 %v173, %v173
    %v176 = vpack.c.bf16 %v174, %v174
    %s177 = sld [smem:[#allocation8 + $0x1]]
    %v178 = vld [vmem:[#allocation2] sm:$0xff]
    %v179 = vld [vmem:[#allocation2 + $0x8] sm:$0xff]
    %v180 = vld [vmem:[#allocation2 + $0x10] sm:$0xff]
    %v181 = vld [vmem:[#allocation2 + $0x18] sm:$0xff]
    %v182 = vld [vmem:[#allocation2 + $0x20] sm:$0xff]
    %v183 = vld [vmem:[#allocation2 + $0x28] sm:$0xff]
    %v184 = vld [vmem:[#allocation2 + $0x30] sm:$0xff]
    %v185 = vld [vmem:[#allocation2 + $0x38] sm:$0xff]
    %v186 = vld [vmem:[#allocation2 + $0x40] sm:$0xff]
    %v187 = vld [vmem:[#allocation2 + $0x48] sm:$0xff]
    %v188 = vld [vmem:[#allocation2 + $0x50] sm:$0xff]
    %v189 = vld [vmem:[#allocation2 + $0x58] sm:$0xff]
    %v190 = vld [vmem:[#allocation2 + $0x60] sm:$0xff]
    %v191 = vld [vmem:[#allocation2 + $0x68] sm:$0xff]
    %v192 = vld [vmem:[#allocation2 + $0x70] sm:$0xff]
    %v193 = vld [vmem:[#allocation2 + $0x78] sm:$0xff]
    %v194 = vld [vmem:[#allocation2 + $0x80] sm:$0xff]
    %v195 = vld [vmem:[#allocation2 + $0x88] sm:$0xff]
    %v196 = vld [vmem:[#allocation2 + $0x90] sm:$0xff]
    %v197 = vld [vmem:[#allocation2 + $0x98] sm:$0xff]
    %v198 = vld [vmem:[#allocation2 + $0xa0] sm:$0xff]
    %v199 = vld [vmem:[#allocation2 + $0xa8] sm:$0xff]
    %v200 = vld [vmem:[#allocation2 + $0xb0] sm:$0xff]
    %v201 = vld [vmem:[#allocation2 + $0xb8] sm:$0xff]
    %v202 = vld [vmem:[#allocation2 + $0xc0] sm:$0xff]
    %v203 = vld [vmem:[#allocation2 + $0xc8] sm:$0xff]
    %v204 = vld [vmem:[#allocation2 + $0xd0] sm:$0xff]
    %v205 = vld [vmem:[#allocation2 + $0xd8] sm:$0xff]
    %v206 = vld [vmem:[#allocation2 + $0xe0] sm:$0xff]
    %v207 = vld [vmem:[#allocation2 + $0xe8] sm:$0xff]
    %v208 = vld [vmem:[#allocation2 + $0xf0] sm:$0xff]
    %v209 = vld [vmem:[#allocation2 + $0xf8] sm:$0xff]
    %v210 = vld [vmem:[%s4] sm:$0x3]
    %v212 = vlaneseq
    %v213 = vshrl.u32 %v212, 7
    %v214 = vsub.s32 0, %v213
    %v215 = vrot.slane %v210, %v214
    %v216 = vlaneseq
    %v217 = vshrl.u32 %v216, 7
    %v218 = vsub.s32 1, %v217
    %v219 = vrot.slane %v210, %v218
    %v254 = vunpack.c.l.b16 %v178
    %v255 = vunpack.c.h.b16 %v178
    %v256 = vunpack.c.l.b16 %v179
    %v257 = vunpack.c.h.b16 %v179
    %v258 = vunpack.c.l.b16 %v180
    %v259 = vunpack.c.h.b16 %v180
    %v260 = vunpack.c.l.b16 %v181
    %v261 = vunpack.c.h.b16 %v181
    %v262 = vunpack.c.l.b16 %v182
    %v263 = vunpack.c.h.b16 %v182
    %v264 = vunpack.c.l.b16 %v183
    %v265 = vunpack.c.h.b16 %v183
    %v266 = vunpack.c.l.b16 %v184
    %v267 = vunpack.c.h.b16 %v184
    %v268 = vunpack.c.l.b16 %v185
    %v269 = vunpack.c.h.b16 %v185
    %v270 = vunpack.c.l.b16 %v186
    %v271 = vunpack.c.h.b16 %v186
    %v272 = vunpack.c.l.b16 %v187
    %v273 = vunpack.c.h.b16 %v187
    %v274 = vunpack.c.l.b16 %v188
    %v275 = vunpack.c.h.b16 %v188
    %v276 = vunpack.c.l.b16 %v189
    %v277 = vunpack.c.h.b16 %v189
    %v278 = vunpack.c.l.b16 %v190
    %v279 = vunpack.c.h.b16 %v190
    %v280 = vunpack.c.l.b16 %v191
    %v281 = vunpack.c.h.b16 %v191
    %v282 = vunpack.c.l.b16 %v192
    %v283 = vunpack.c.h.b16 %v192
    %v284 = vunpack.c.l.b16 %v193
    %v285 = vunpack.c.h.b16 %v193
    %v286 = vunpack.c.l.b16 %v194
    %v287 = vunpack.c.h.b16 %v194
    %v288 = vunpack.c.l.b16 %v195
    %v289 = vunpack.c.h.b16 %v195
    %v290 = vunpack.c.l.b16 %v196
    %v291 = vunpack.c.h.b16 %v196
    %v292 = vunpack.c.l.b16 %v197
    %v293 = vunpack.c.h.b16 %v197
    %v294 = vunpack.c.l.b16 %v198
    %v295 = vunpack.c.h.b16 %v198
    %v296 = vunpack.c.l.b16 %v199
    %v297 = vunpack.c.h.b16 %v199
    %v298 = vunpack.c.l.b16 %v200
    %v299 = vunpack.c.h.b16 %v200
    %v300 = vunpack.c.l.b16 %v201
    %v301 = vunpack.c.h.b16 %v201
    %v302 = vunpack.c.l.b16 %v202
    %v303 = vunpack.c.h.b16 %v202
    %v304 = vunpack.c.l.b16 %v203
    %v305 = vunpack.c.h.b16 %v203
    %v306 = vunpack.c.l.b16 %v204
    %v307 = vunpack.c.h.b16 %v204
    %v308 = vunpack.c.l.b16 %v205
    %v309 = vunpack.c.h.b16 %v205
    %v310 = vunpack.c.l.b16 %v206
    %v311 = vunpack.c.h.b16 %v206
    %v312 = vunpack.c.l.b16 %v207
    %v313 = vunpack.c.h.b16 %v207
    %v314 = vunpack.c.l.b16 %v208
    %v315 = vunpack.c.h.b16 %v208
    %v316 = vunpack.c.l.b16 %v209
    %v317 = vunpack.c.h.b16 %v209
    %v318 = vpack.c.b16 %v256, %v254
    %v319 = vpack.c.b16 %v257, %v255
    %v320 = vpack.c.b16 %v260, %v258
    %v321 = vpack.c.b16 %v261, %v259
    %v322 = vpack.c.b16 %v264, %v262
    %v323 = vpack.c.b16 %v265, %v263
    %v324 = vpack.c.b16 %v268, %v266
    %v325 = vpack.c.b16 %v269, %v267
    %v326 = vpack.c.b16 %v272, %v270
    %v327 = vpack.c.b16 %v273, %v271
    %v328 = vpack.c.b16 %v276, %v274
    %v329 = vpack.c.b16 %v277, %v275
    %v330 = vpack.c.b16 %v280, %v278
    %v331 = vpack.c.b16 %v281, %v279
    %v332 = vpack.c.b16 %v284, %v282
    %v333 = vpack.c.b16 %v285, %v283
    %v334 = vpack.c.b16 %v288, %v286
    %v335 = vpack.c.b16 %v289, %v287
    %v336 = vpack.c.b16 %v292, %v290
    %v337 = vpack.c.b16 %v293, %v291
    %v338 = vpack.c.b16 %v296, %v294
    %v339 = vpack.c.b16 %v297, %v295
    %v340 = vpack.c.b16 %v300, %v298
    %v341 = vpack.c.b16 %v301, %v299
    %v342 = vpack.c.b16 %v304, %v302
    %v343 = vpack.c.b16 %v305, %v303
    %v344 = vpack.c.b16 %v308, %v306
    %v345 = vpack.c.b16 %v309, %v307
    %v346 = vpack.c.b16 %v312, %v310
    %v347 = vpack.c.b16 %v313, %v311
    %v348 = vpack.c.b16 %v316, %v314
    %v349 = vpack.c.b16 %v317, %v315
    %382 = vmatprep.subr.bf16.mxu0 %v319
    %383 = vmatpush1.bf16.msra.mxu0 %v318
    %384 = vmatprep.subr.bf16.mxu0 %v321
    %385 = vmatpush1.bf16.msra.mxu0 %v320
    %386 = vmatprep.subr.bf16.mxu0 %v323
    %387 = vmatpush1.bf16.msra.mxu0 %v322
    %388 = vmatprep.subr.bf16.mxu0 %v325
    %389 = vmatpush1.bf16.msra.mxu0 %v324
    %390 = vmatprep.subr.bf16.mxu0 %v327
    %391 = vmatpush1.bf16.msra.mxu0 %v326
    %392 = vmatprep.subr.bf16.mxu0 %v329
    %393 = vmatpush1.bf16.msra.mxu0 %v328
    %394 = vmatprep.subr.bf16.mxu0 %v331
    %395 = vmatpush1.bf16.msra.mxu0 %v330
    %396 = vmatprep.subr.bf16.mxu0 %v333
    %397 = vmatpush1.bf16.msra.mxu0 %v332
    %398 = vmatprep.subr.bf16.mxu0 %v335
    %399 = vmatpush1.bf16.msra.mxu0 %v334
    %400 = vmatprep.subr.bf16.mxu0 %v337
    %401 = vmatpush1.bf16.msra.mxu0 %v336
    %402 = vmatprep.subr.bf16.mxu0 %v339
    %403 = vmatpush1.bf16.msra.mxu0 %v338
    %404 = vmatprep.subr.bf16.mxu0 %v341
    %405 = vmatpush1.bf16.msra.mxu0 %v340
    %406 = vmatprep.subr.bf16.mxu0 %v343
    %407 = vmatpush1.bf16.msra.mxu0 %v342
    %408 = vmatprep.subr.bf16.mxu0 %v345
    %409 = vmatpush1.bf16.msra.mxu0 %v344
    %410 = vmatprep.subr.bf16.mxu0 %v347
    %411 = vmatpush1.bf16.msra.mxu0 %v346
    %412 = vmatprep.subr.bf16.mxu0 %v349
    %413 = vmatpush1.bf16.msra.mxu0 %v348
    %414 = vmatprep.mubr.bf16.mxu0 %v176
    %415 = vmatmul.mubr.bf16.gmra.mrb[0].mxu0 %v175
    %v416 = vpop.f32.mrb[0].mxu0
    %v417 = vadd.f32 %v215, %v416
    %v418 = vpop.f32.mrb[0].mxu0
    %v419 = vadd.f32 %v219, %v418
    %v420 = vpop.f32.mrb[0].mxu0
    %v421 = vpop.f32.mrb[0].mxu0
    %422 = vdwg.mxu0
    %vm423 = vcmp.ge.f32.partialorder %v417, 0.0
    %vm424 = vcmp.ge.f32.partialorder %v419, 0.0
    %v425 = vstv %s177
    %v426 = vmul.f32 %v425, %v417
    %v427 = vmul.f32 %v425, %v419
    %v428 = vsel %vm423, %v417, %v426
    %v429 = vsel %vm424, %v419, %v427
    %v430 = vpack.c.bf16 %v428, %v428
    %v431 = vpack.c.bf16 %v429, %v429
    %s432 = sld [smem:[#allocation8 + $0x2]]
    %v433 = vld [vmem:[#allocation5] sm:$0xff]
    %v434 = vld [vmem:[#allocation5 + $0x8] sm:$0xff]
    %v435 = vld [vmem:[#allocation5 + $0x10] sm:$0xff]
    %v436 = vld [vmem:[#allocation5 + $0x18] sm:$0xff]
    %v437 = vld [vmem:[#allocation5 + $0x20] sm:$0xff]
    %v438 = vld [vmem:[#allocation5 + $0x28] sm:$0xff]
    %v439 = vld [vmem:[#allocation5 + $0x30] sm:$0xff]
    %v440 = vld [vmem:[#allocation5 + $0x38] sm:$0xff]
    %v441 = vld [vmem:[#allocation5 + $0x40] sm:$0xff]
    %v442 = vld [vmem:[#allocation5 + $0x48] sm:$0xff]
    %v443 = vld [vmem:[#allocation5 + $0x50] sm:$0xff]
    %v444 = vld [vmem:[#allocation5 + $0x58] sm:$0xff]
    %v445 = vld [vmem:[#allocation5 + $0x60] sm:$0xff]
    %v446 = vld [vmem:[#allocation5 + $0x68] sm:$0xff]
    %v447 = vld [vmem:[#allocation5 + $0x70] sm:$0xff]
    %v448 = vld [vmem:[#allocation5 + $0x78] sm:$0xff]
    %v449 = vld [vmem:[#allocation5 + $0x80] sm:$0xff]
    %v450 = vld [vmem:[#allocation5 + $0x88] sm:$0xff]
    %v451 = vld [vmem:[#allocation5 + $0x90] sm:$0xff]
    %v452 = vld [vmem:[#allocation5 + $0x98] sm:$0xff]
    %v453 = vld [vmem:[#allocation5 + $0xa0] sm:$0xff]
    %v454 = vld [vmem:[#allocation5 + $0xa8] sm:$0xff]
    %v455 = vld [vmem:[#allocation5 + $0xb0] sm:$0xff]
    %v456 = vld [vmem:[#allocation5 + $0xb8] sm:$0xff]
    %v457 = vld [vmem:[#allocation5 + $0xc0] sm:$0xff]
    %v458 = vld [vmem:[#allocation5 + $0xc8] sm:$0xff]
    %v459 = vld [vmem:[#allocation5 + $0xd0] sm:$0xff]
    %v460 = vld [vmem:[#allocation5 + $0xd8] sm:$0xff]
    %v461 = vld [vmem:[#allocation5 + $0xe0] sm:$0xff]
    %v462 = vld [vmem:[#allocation5 + $0xe8] sm:$0xff]
    %v463 = vld [vmem:[#allocation5 + $0xf0] sm:$0xff]
    %v464 = vld [vmem:[#allocation5 + $0xf8] sm:$0xff]
    %v465 = vld [vmem:[%s6] sm:$0x3]
    %v467 = vlaneseq
    %v468 = vshrl.u32 %v467, 7
    %v469 = vsub.s32 0, %v468
    %v470 = vrot.slane %v465, %v469
    %v471 = vlaneseq
    %v472 = vshrl.u32 %v471, 7
    %v473 = vsub.s32 1, %v472
    %v474 = vrot.slane %v465, %v473
    %v509 = vunpack.c.l.b16 %v433
    %v510 = vunpack.c.h.b16 %v433
    %v511 = vunpack.c.l.b16 %v434
    %v512 = vunpack.c.h.b16 %v434
    %v513 = vunpack.c.l.b16 %v435
    %v514 = vunpack.c.h.b16 %v435
    %v515 = vunpack.c.l.b16 %v436
    %v516 = vunpack.c.h.b16 %v436
    %v517 = vunpack.c.l.b16 %v437
    %v518 = vunpack.c.h.b16 %v437
    %v519 = vunpack.c.l.b16 %v438
    %v520 = vunpack.c.h.b16 %v438
    %v521 = vunpack.c.l.b16 %v439
    %v522 = vunpack.c.h.b16 %v439
    %v523 = vunpack.c.l.b16 %v440
    %v524 = vunpack.c.h.b16 %v440
    %v525 = vunpack.c.l.b16 %v441
    %v526 = vunpack.c.h.b16 %v441
    %v527 = vunpack.c.l.b16 %v442
    %v528 = vunpack.c.h.b16 %v442
    %v529 = vunpack.c.l.b16 %v443
    %v530 = vunpack.c.h.b16 %v443
    %v531 = vunpack.c.l.b16 %v444
    %v532 = vunpack.c.h.b16 %v444
    %v533 = vunpack.c.l.b16 %v445
    %v534 = vunpack.c.h.b16 %v445
    %v535 = vunpack.c.l.b16 %v446
    %v536 = vunpack.c.h.b16 %v446
    %v537 = vunpack.c.l.b16 %v447
    %v538 = vunpack.c.h.b16 %v447
    %v539 = vunpack.c.l.b16 %v448
    %v540 = vunpack.c.h.b16 %v448
    %v541 = vunpack.c.l.b16 %v449
    %v542 = vunpack.c.h.b16 %v449
    %v543 = vunpack.c.l.b16 %v450
    %v544 = vunpack.c.h.b16 %v450
    %v545 = vunpack.c.l.b16 %v451
    %v546 = vunpack.c.h.b16 %v451
    %v547 = vunpack.c.l.b16 %v452
    %v548 = vunpack.c.h.b16 %v452
    %v549 = vunpack.c.l.b16 %v453
    %v550 = vunpack.c.h.b16 %v453
    %v551 = vunpack.c.l.b16 %v454
    %v552 = vunpack.c.h.b16 %v454
    %v553 = vunpack.c.l.b16 %v455
    %v554 = vunpack.c.h.b16 %v455
    %v555 = vunpack.c.l.b16 %v456
    %v556 = vunpack.c.h.b16 %v456
    %v557 = vunpack.c.l.b16 %v457
    %v558 = vunpack.c.h.b16 %v457
    %v559 = vunpack.c.l.b16 %v458
    %v560 = vunpack.c.h.b16 %v458
    %v561 = vunpack.c.l.b16 %v459
    %v562 = vunpack.c.h.b16 %v459
    %v563 = vunpack.c.l.b16 %v460
    %v564 = vunpack.c.h.b16 %v460
    %v565 = vunpack.c.l.b16 %v461
    %v566 = vunpack.c.h.b16 %v461
    %v567 = vunpack.c.l.b16 %v462
    %v568 = vunpack.c.h.b16 %v462
    %v569 = vunpack.c.l.b16 %v463
    %v570 = vunpack.c.h.b16 %v463
    %v571 = vunpack.c.l.b16 %v464
    %v572 = vunpack.c.h.b16 %v464
    %v573 = vpack.c.b16 %v511, %v509
    %v574 = vpack.c.b16 %v512, %v510
    %v575 = vpack.c.b16 %v515, %v513
    %v576 = vpack.c.b16 %v516, %v514
    %v577 = vpack.c.b16 %v519, %v517
    %v578 = vpack.c.b16 %v520, %v518
    %v579 = vpack.c.b16 %v523, %v521
    %v580 = vpack.c.b16 %v524, %v522
    %v581 = vpack.c.b16 %v527, %v525
    %v582 = vpack.c.b16 %v528, %v526
    %v583 = vpack.c.b16 %v531, %v529
    %v584 = vpack.c.b16 %v532, %v530
    %v585 = vpack.c.b16 %v535, %v533
    %v586 = vpack.c.b16 %v536, %v534
    %v587 = vpack.c.b16 %v539, %v537
    %v588 = vpack.c.b16 %v540, %v538
    %v589 = vpack.c.b16 %v543, %v541
    %v590 = vpack.c.b16 %v544, %v542
    %v591 = vpack.c.b16 %v547, %v545
    %v592 = vpack.c.b16 %v548, %v546
    %v593 = vpack.c.b16 %v551, %v549
    %v594 = vpack.c.b16 %v552, %v550
    %v595 = vpack.c.b16 %v555, %v553
    %v596 = vpack.c.b16 %v556, %v554
    %v597 = vpack.c.b16 %v559, %v557
    %v598 = vpack.c.b16 %v560, %v558
    %v599 = vpack.c.b16 %v563, %v561
    %v600 = vpack.c.b16 %v564, %v562
    %v601 = vpack.c.b16 %v567, %v565
    %v602 = vpack.c.b16 %v568, %v566
    %v603 = vpack.c.b16 %v571, %v569
    %v604 = vpack.c.b16 %v572, %v570
    %637 = vmatprep.subr.bf16.mxu0 %v574
    %638 = vmatpush1.bf16.msra.mxu0 %v573
    %639 = vmatprep.subr.bf16.mxu0 %v576
    %640 = vmatpush1.bf16.msra.mxu0 %v575
    %641 = vmatprep.subr.bf16.mxu0 %v578
    %642 = vmatpush1.bf16.msra.mxu0 %v577
    %643 = vmatprep.subr.bf16.mxu0 %v580
    %644 = vmatpush1.bf16.msra.mxu0 %v579
    %645 = vmatprep.subr.bf16.mxu0 %v582
    %646 = vmatpush1.bf16.msra.mxu0 %v581
    %647 = vmatprep.subr.bf16.mxu0 %v584
    %648 = vmatpush1.bf16.msra.mxu0 %v583
    %649 = vmatprep.subr.bf16.mxu0 %v586
    %650 = vmatpush1.bf16.msra.mxu0 %v585
    %651 = vmatprep.subr.bf16.mxu0 %v588
    %652 = vmatpush1.bf16.msra.mxu0 %v587
    %653 = vmatprep.subr.bf16.mxu0 %v590
    %654 = vmatpush1.bf16.msra.mxu0 %v589
    %655 = vmatprep.subr.bf16.mxu0 %v592
    %656 = vmatpush1.bf16.msra.mxu0 %v591
    %657 = vmatprep.subr.bf16.mxu0 %v594
    %658 = vmatpush1.bf16.msra.mxu0 %v593
    %659 = vmatprep.subr.bf16.mxu0 %v596
    %660 = vmatpush1.bf16.msra.mxu0 %v595
    %661 = vmatprep.subr.bf16.mxu0 %v598
    %662 = vmatpush1.bf16.msra.mxu0 %v597
    %663 = vmatprep.subr.bf16.mxu0 %v600
    %664 = vmatpush1.bf16.msra.mxu0 %v599
    %665 = vmatprep.subr.bf16.mxu0 %v602
    %666 = vmatpush1.bf16.msra.mxu0 %v601
    %667 = vmatprep.subr.bf16.mxu0 %v604
    %668 = vmatpush1.bf16.msra.mxu0 %v603
    %669 = vmatprep.mubr.bf16.mxu0 %v431
    %670 = vmatmul.mubr.bf16.gmra.mrb[0].mxu0 %v430
    %v671 = vpop.f32.mrb[0].mxu0
    %v672 = vadd.f32 %v470, %v671
    %v673 = vpop.f32.mrb[0].mxu0
    %v674 = vadd.f32 %v474, %v673
    %v675 = vpop.f32.mrb[0].mxu0
    %v676 = vpop.f32.mrb[0].mxu0
    %677 = vdwg.mxu0
    %vm678 = vcmp.ge.f32.partialorder %v672, 0.0
    %vm679 = vcmp.ge.f32.partialorder %v674, 0.0
    %v680 = vstv %s432
    %v681 = vmul.f32 %v680, %v672
    %v682 = vmul.f32 %v680, %v674
    %v683 = vsel %vm678, %v672, %v681
    %v684 = vsel %vm679, %v674, %v682
    %v685 = vpack.c.bf16 %v683, %v683
    %v686 = vpack.c.bf16 %v684, %v684
    %s687 = sld [smem:[#allocation8 + $0x3]]
    %v688 = vld [vmem:[#allocation7] sm:$0xff]
    %v689 = vld [vmem:[#allocation7 + $0x8] sm:$0xff]
    %v690 = vld [vmem:[#allocation7 + $0x10] sm:$0xff]
    %v691 = vld [vmem:[#allocation7 + $0x18] sm:$0xff]
    %v692 = vld [vmem:[#allocation7 + $0x20] sm:$0xff]
    %v693 = vld [vmem:[#allocation7 + $0x28] sm:$0xff]
    %v694 = vld [vmem:[#allocation7 + $0x30] sm:$0xff]
    %v695 = vld [vmem:[#allocation7 + $0x38] sm:$0xff]
    %v696 = vld [vmem:[#allocation7 + $0x40] sm:$0xff]
    %v697 = vld [vmem:[#allocation7 + $0x48] sm:$0xff]
    %v698 = vld [vmem:[#allocation7 + $0x50] sm:$0xff]
    %v699 = vld [vmem:[#allocation7 + $0x58] sm:$0xff]
    %v700 = vld [vmem:[#allocation7 + $0x60] sm:$0xff]
    %v701 = vld [vmem:[#allocation7 + $0x68] sm:$0xff]
    %v702 = vld [vmem:[#allocation7 + $0x70] sm:$0xff]
    %v703 = vld [vmem:[#allocation7 + $0x78] sm:$0xff]
    %v704 = vld [vmem:[#allocation7 + $0x80] sm:$0xff]
    %v705 = vld [vmem:[#allocation7 + $0x88] sm:$0xff]
    %v706 = vld [vmem:[#allocation7 + $0x90] sm:$0xff]
    %v707 = vld [vmem:[#allocation7 + $0x98] sm:$0xff]
    %v708 = vld [vmem:[#allocation7 + $0xa0] sm:$0xff]
    %v709 = vld [vmem:[#allocation7 + $0xa8] sm:$0xff]
    %v710 = vld [vmem:[#allocation7 + $0xb0] sm:$0xff]
    %v711 = vld [vmem:[#allocation7 + $0xb8] sm:$0xff]
    %v712 = vld [vmem:[#allocation7 + $0xc0] sm:$0xff]
    %v713 = vld [vmem:[#allocation7 + $0xc8] sm:$0xff]
    %v714 = vld [vmem:[#allocation7 + $0xd0] sm:$0xff]
    %v715 = vld [vmem:[#allocation7 + $0xd8] sm:$0xff]
    %v716 = vld [vmem:[#allocation7 + $0xe0] sm:$0xff]
    %v717 = vld [vmem:[#allocation7 + $0xe8] sm:$0xff]
    %v718 = vld [vmem:[#allocation7 + $0xf0] sm:$0xff]
    %v719 = vld [vmem:[#allocation7 + $0xf8] sm:$0xff]
    %v720 = vld [vmem:[%s8] sm:$0x3]
    %v722 = vlaneseq
    %v723 = vshrl.u32 %v722, 7
    %v724 = vsub.s32 0, %v723
    %v725 = vrot.slane %v720, %v724
    %v726 = vlaneseq
    %v727 = vshrl.u32 %v726, 7
    %v728 = vsub.s32 1, %v727
    %v729 = vrot.slane %v720, %v728
    %v764 = vunpack.c.l.b16 %v688
    %v765 = vunpack.c.h.b16 %v688
    %v766 = vunpack.c.l.b16 %v689
    %v767 = vunpack.c.h.b16 %v689
    %v768 = vunpack.c.l.b16 %v690
    %v769 = vunpack.c.h.b16 %v690
    %v770 = vunpack.c.l.b16 %v691
    %v771 = vunpack.c.h.b16 %v691
    %v772 = vunpack.c.l.b16 %v692
    %v773 = vunpack.c.h.b16 %v692
    %v774 = vunpack.c.l.b16 %v693
    %v775 = vunpack.c.h.b16 %v693
    %v776 = vunpack.c.l.b16 %v694
    %v777 = vunpack.c.h.b16 %v694
    %v778 = vunpack.c.l.b16 %v695
    %v779 = vunpack.c.h.b16 %v695
    %v780 = vunpack.c.l.b16 %v696
    %v781 = vunpack.c.h.b16 %v696
    %v782 = vunpack.c.l.b16 %v697
    %v783 = vunpack.c.h.b16 %v697
    %v784 = vunpack.c.l.b16 %v698
    %v785 = vunpack.c.h.b16 %v698
    %v786 = vunpack.c.l.b16 %v699
    %v787 = vunpack.c.h.b16 %v699
    %v788 = vunpack.c.l.b16 %v700
    %v789 = vunpack.c.h.b16 %v700
    %v790 = vunpack.c.l.b16 %v701
    %v791 = vunpack.c.h.b16 %v701
    %v792 = vunpack.c.l.b16 %v702
    %v793 = vunpack.c.h.b16 %v702
    %v794 = vunpack.c.l.b16 %v703
    %v795 = vunpack.c.h.b16 %v703
    %v796 = vunpack.c.l.b16 %v704
    %v797 = vunpack.c.h.b16 %v704
    %v798 = vunpack.c.l.b16 %v705
    %v799 = vunpack.c.h.b16 %v705
    %v800 = vunpack.c.l.b16 %v706
    %v801 = vunpack.c.h.b16 %v706
    %v802 = vunpack.c.l.b16 %v707
    %v803 = vunpack.c.h.b16 %v707
    %v804 = vunpack.c.l.b16 %v708
    %v805 = vunpack.c.h.b16 %v708
    %v806 = vunpack.c.l.b16 %v709
    %v807 = vunpack.c.h.b16 %v709
    %v808 = vunpack.c.l.b16 %v710
    %v809 = vunpack.c.h.b16 %v710
    %v810 = vunpack.c.l.b16 %v711
    %v811 = vunpack.c.h.b16 %v711
    %v812 = vunpack.c.l.b16 %v712
    %v813 = vunpack.c.h.b16 %v712
    %v814 = vunpack.c.l.b16 %v713
    %v815 = vunpack.c.h.b16 %v713
    %v816 = vunpack.c.l.b16 %v714
    %v817 = vunpack.c.h.b16 %v714
    %v818 = vunpack.c.l.b16 %v715
    %v819 = vunpack.c.h.b16 %v715
    %v820 = vunpack.c.l.b16 %v716
    %v821 = vunpack.c.h.b16 %v716
    %v822 = vunpack.c.l.b16 %v717
    %v823 = vunpack.c.h.b16 %v717
    %v824 = vunpack.c.l.b16 %v718
    %v825 = vunpack.c.h.b16 %v718
    %v826 = vunpack.c.l.b16 %v719
    %v827 = vunpack.c.h.b16 %v719
    %v828 = vpack.c.b16 %v766, %v764
    %v829 = vpack.c.b16 %v767, %v765
    %v830 = vpack.c.b16 %v770, %v768
    %v831 = vpack.c.b16 %v771, %v769
    %v832 = vpack.c.b16 %v774, %v772
    %v833 = vpack.c.b16 %v775, %v773
    %v834 = vpack.c.b16 %v778, %v776
    %v835 = vpack.c.b16 %v779, %v777
    %v836 = vpack.c.b16 %v782, %v780
    %v837 = vpack.c.b16 %v783, %v781
    %v838 = vpack.c.b16 %v786, %v784
    %v839 = vpack.c.b16 %v787, %v785
    %v840 = vpack.c.b16 %v790, %v788
    %v841 = vpack.c.b16 %v791, %v789
    %v842 = vpack.c.b16 %v794, %v792
    %v843 = vpack.c.b16 %v795, %v793
    %v844 = vpack.c.b16 %v798, %v796
    %v845 = vpack.c.b16 %v799, %v797
    %v846 = vpack.c.b16 %v802, %v800
    %v847 = vpack.c.b16 %v803, %v801
    %v848 = vpack.c.b16 %v806, %v804
    %v849 = vpack.c.b16 %v807, %v805
    %v850 = vpack.c.b16 %v810, %v808
    %v851 = vpack.c.b16 %v811, %v809
    %v852 = vpack.c.b16 %v814, %v812
    %v853 = vpack.c.b16 %v815, %v813
    %v854 = vpack.c.b16 %v818, %v816
    %v855 = vpack.c.b16 %v819, %v817
    %v856 = vpack.c.b16 %v822, %v820
    %v857 = vpack.c.b16 %v823, %v821
    %v858 = vpack.c.b16 %v826, %v824
    %v859 = vpack.c.b16 %v827, %v825
    %892 = vmatprep.subr.bf16.mxu0 %v829
    %893 = vmatpush1.bf16.msra.mxu0 %v828
    %894 = vmatprep.subr.bf16.mxu0 %v831
    %895 = vmatpush1.bf16.msra.mxu0 %v830
    %896 = vmatprep.subr.bf16.mxu0 %v833
    %897 = vmatpush1.bf16.msra.mxu0 %v832
    %898 = vmatprep.subr.bf16.mxu0 %v835
    %899 = vmatpush1.bf16.msra.mxu0 %v834
    %900 = vmatprep.subr.bf16.mxu0 %v837
    %901 = vmatpush1.bf16.msra.mxu0 %v836
    %902 = vmatprep.subr.bf16.mxu0 %v839
    %903 = vmatpush1.bf16.msra.mxu0 %v838
    %904 = vmatprep.subr.bf16.mxu0 %v841
    %905 = vmatpush1.bf16.msra.mxu0 %v840
    %906 = vmatprep.subr.bf16.mxu0 %v843
    %907 = vmatpush1.bf16.msra.mxu0 %v842
    %908 = vmatprep.subr.bf16.mxu0 %v845
    %909 = vmatpush1.bf16.msra.mxu0 %v844
    %910 = vmatprep.subr.bf16.mxu0 %v847
    %911 = vmatpush1.bf16.msra.mxu0 %v846
    %912 = vmatprep.subr.bf16.mxu0 %v849
    %913 = vmatpush1.bf16.msra.mxu0 %v848
    %914 = vmatprep.subr.bf16.mxu0 %v851
    %915 = vmatpush1.bf16.msra.mxu0 %v850
    %916 = vmatprep.subr.bf16.mxu0 %v853
    %917 = vmatpush1.bf16.msra.mxu0 %v852
    %918 = vmatprep.subr.bf16.mxu0 %v855
    %919 = vmatpush1.bf16.msra.mxu0 %v854
    %920 = vmatprep.subr.bf16.mxu0 %v857
    %921 = vmatpush1.bf16.msra.mxu0 %v856
    %922 = vmatprep.subr.bf16.mxu0 %v859
    %923 = vmatpush1.bf16.msra.mxu0 %v858
    %924 = vmatprep.mubr.bf16.mxu0 %v686
    %925 = vmatmul.mubr.bf16.gmra.mrb[0].mxu0 %v685
    %v926 = vpop.f32.mrb[0].mxu0
    %v927 = vadd.f32 %v725, %v926
    %v928 = vpop.f32.mrb[0].mxu0
    %v929 = vadd.f32 %v729, %v928
    %v930 = vpop.f32.mrb[0].mxu0
    %v931 = vpop.f32.mrb[0].mxu0
    %932 = vdwg.mxu0
    %vm933 = vcmp.ge.f32.partialorder %v927, 0.0
    %vm934 = vcmp.ge.f32.partialorder %v929, 0.0
    %v935 = vstv %s687
    %v936 = vmul.f32 %v935, %v927
    %v937 = vmul.f32 %v935, %v929
    %v938 = vsel %vm933, %v927, %v936
    %v939 = vsel %vm934, %v929, %v937
    %v940 = vpack.c.bf16 %v938, %v938
    %v941 = vpack.c.bf16 %v939, %v939
    %v942 = vld [vmem:[%s9] sm:$0xf]
    %v943 = vld [vmem:[%s9 + $0x4] sm:$0xf]
    %v944 = vld [vmem:[%s9 + $0x8] sm:$0xf]
    %v945 = vld [vmem:[%s9 + $0xc] sm:$0xf]
    %v946 = vld [vmem:[%s9 + $0x10] sm:$0xf]
    %v947 = vld [vmem:[%s9 + $0x14] sm:$0xf]
    %v948 = vld [vmem:[%s9 + $0x18] sm:$0xf]
    %v949 = vld [vmem:[%s9 + $0x1c] sm:$0xf]
    %v950 = vld [vmem:[%s9 + $0x20] sm:$0xf]
    %v951 = vld [vmem:[%s9 + $0x24] sm:$0xf]
    %v952 = vld [vmem:[%s9 + $0x28] sm:$0xf]
    %v953 = vld [vmem:[%s9 + $0x2c] sm:$0xf]
    %v954 = vld [vmem:[%s9 + $0x30] sm:$0xf]
    %v955 = vld [vmem:[%s9 + $0x34] sm:$0xf]
    %v956 = vld [vmem:[%s9 + $0x38] sm:$0xf]
    %v957 = vld [vmem:[%s9 + $0x3c] sm:$0xf]
    %v958 = vld [vmem:[%s9 + $0x40] sm:$0xf]
    %v959 = vld [vmem:[%s9 + $0x44] sm:$0xf]
    %v960 = vld [vmem:[%s9 + $0x48] sm:$0xf]
    %v961 = vld [vmem:[%s9 + $0x4c] sm:$0xf]
    %v962 = vld [vmem:[%s9 + $0x50] sm:$0xf]
    %v963 = vld [vmem:[%s9 + $0x54] sm:$0xf]
    %v964 = vld [vmem:[%s9 + $0x58] sm:$0xf]
    %v965 = vld [vmem:[%s9 + $0x5c] sm:$0xf]
    %v966 = vld [vmem:[%s9 + $0x60] sm:$0xf]
    %v967 = vld [vmem:[%s9 + $0x64] sm:$0xf]
    %v968 = vld [vmem:[%s9 + $0x68] sm:$0xf]
    %v969 = vld [vmem:[%s9 + $0x6c] sm:$0xf]
    %v970 = vld [vmem:[%s9 + $0x70] sm:$0xf]
    %v971 = vld [vmem:[%s9 + $0x74] sm:$0xf]
    %v972 = vld [vmem:[%s9 + $0x78] sm:$0xf]
    %v973 = vld [vmem:[%s9 + $0x7c] sm:$0xf]
    %v974 = vld [vmem:[%s10] sm:$0x1]
    %v976 = vlaneseq
    %v977 = vshrl.u32 %v976, 7
    %v978 = vsub.s32 0, %v977
    %v979 = vrot.slane %v974, %v978
    %v1013 = vunpack.c.l.b16 %v942
    %v1014 = vunpack.c.l.b16 %v943
    %v1015 = vunpack.c.l.b16 %v944
    %v1016 = vunpack.c.l.b16 %v945
    %v1017 = vunpack.c.l.b16 %v946
    %v1018 = vunpack.c.l.b16 %v947
    %v1019 = vunpack.c.l.b16 %v948
    %v1020 = vunpack.c.l.b16 %v949
    %v1021 = vunpack.c.l.b16 %v950
    %v1022 = vunpack.c.l.b16 %v951
    %v1023 = vunpack.c.l.b16 %v952
    %v1024 = vunpack.c.l.b16 %v953
    %v1025 = vunpack.c.l.b16 %v954
    %v1026 = vunpack.c.l.b16 %v955
    %v1027 = vunpack.c.l.b16 %v956
    %v1028 = vunpack.c.l.b16 %v957
    %v1029 = vunpack.c.l.b16 %v958
    %v1030 = vunpack.c.l.b16 %v959
    %v1031 = vunpack.c.l.b16 %v960
    %v1032 = vunpack.c.l.b16 %v961
    %v1033 = vunpack.c.l.b16 %v962
    %v1034 = vunpack.c.l.b16 %v963
    %v1035 = vunpack.c.l.b16 %v964
    %v1036 = vunpack.c.l.b16 %v965
    %v1037 = vunpack.c.l.b16 %v966
    %v1038 = vunpack.c.l.b16 %v967
    %v1039 = vunpack.c.l.b16 %v968
    %v1040 = vunpack.c.l.b16 %v969
    %v1041 = vunpack.c.l.b16 %v970
    %v1042 = vunpack.c.l.b16 %v971
    %v1043 = vunpack.c.l.b16 %v972
    %v1044 = vunpack.c.l.b16 %v973
    %v1045 = vpack.c.b16 %v1014, %v1013
    %v1046 = vpack.c.b16 %v1016, %v1015
    %v1047 = vpack.c.b16 %v1018, %v1017
    %v1048 = vpack.c.b16 %v1020, %v1019
    %v1049 = vpack.c.b16 %v1022, %v1021
    %v1050 = vpack.c.b16 %v1024, %v1023
    %v1051 = vpack.c.b16 %v1026, %v1025
    %v1052 = vpack.c.b16 %v1028, %v1027
    %v1053 = vpack.c.b16 %v1030, %v1029
    %v1054 = vpack.c.b16 %v1032, %v1031
    %v1055 = vpack.c.b16 %v1034, %v1033
    %v1056 = vpack.c.b16 %v1036, %v1035
    %v1057 = vpack.c.b16 %v1038, %v1037
    %v1058 = vpack.c.b16 %v1040, %v1039
    %v1059 = vpack.c.b16 %v1042, %v1041
    %v1060 = vpack.c.b16 %v1044, %v1043
    %1077 = vmatprep.subr.bf16.mxu0 0
    %1078 = vmatpush1.bf16.msra.mxu0 %v1045
    %1079 = vmatprep.subr.bf16.mxu0 0
    %1080 = vmatpush1.bf16.msra.mxu0 %v1046
    %1081 = vmatprep.subr.bf16.mxu0 0
    %1082 = vmatpush1.bf16.msra.mxu0 %v1047
    %1083 = vmatprep.subr.bf16.mxu0 0
    %1084 = vmatpush1.bf16.msra.mxu0 %v1048
    %1085 = vmatprep.subr.bf16.mxu0 0
    %1086 = vmatpush1.bf16.msra.mxu0 %v1049
    %1087 = vmatprep.subr.bf16.mxu0 0
    %1088 = vmatpush1.bf16.msra.mxu0 %v1050
    %1089 = vmatprep.subr.bf16.mxu0 0
    %1090 = vmatpush1.bf16.msra.mxu0 %v1051
    %1091 = vmatprep.subr.bf16.mxu0 0
    %1092 = vmatpush1.bf16.msra.mxu0 %v1052
    %1093 = vmatprep.subr.bf16.mxu0 0
    %1094 = vmatpush1.bf16.msra.mxu0 %v1053
    %1095 = vmatprep.subr.bf16.mxu0 0
    %1096 = vmatpush1.bf16.msra.mxu0 %v1054
    %1097 = vmatprep.subr.bf16.mxu0 0
    %1098 = vmatpush1.bf16.msra.mxu0 %v1055
    %1099 = vmatprep.subr.bf16.mxu0 0
    %1100 = vmatpush1.bf16.msra.mxu0 %v1056
    %1101 = vmatprep.subr.bf16.mxu0 0
    %1102 = vmatpush1.bf16.msra.mxu0 %v1057
    %1103 = vmatprep.subr.bf16.mxu0 0
    %1104 = vmatpush1.bf16.msra.mxu0 %v1058
    %1105 = vmatprep.subr.bf16.mxu0 0
    %1106 = vmatpush1.bf16.msra.mxu0 %v1059
    %1107 = vmatprep.subr.bf16.mxu0 0
    %1108 = vmatpush1.bf16.msra.mxu0 %v1060
    %1109 = vmatprep.mubr.bf16.mxu0 %v941
    %1110 = vmatmul.mubr.bf16.gmra.mrb[0].mxu0 %v940
    %v1111 = vpop.f32.mrb[0].mxu0
    %v1112 = vadd.f32 %v979, %v1111
    %v1113 = vpop.f32.mrb[0].mxu0
    %v1114 = vpop.f32.mrb[0].mxu0
    %v1115 = vpop.f32.mrb[0].mxu0
    %1116 = vdwg.mxu0
    %v1117 = vtanh.pop %v1112
    %v1118 = vmul.f32 %v1117, 2.0
    %vm1119 = vcmask 31744
    %1120 = vst.msk [vmem:[%s12] sm:$0xff] %vm1119, %v1118
    // Predicated region
    $region66: #{tpu_custom_call.1} parent=1 // pred_check
      _
    $region67: #{tpu_custom_call.1} parent=1 // pred_check_branch
      %1122 = sbr.rel (0) target = $region69
    $region68: #{tpu_custom_call.1} parent=1 // pred_region
      _
    $region69: #{tpu_custom_call.1} parent=1 // pred_fallthru
      _
    // Predicated region
    $region70: #{tpu_custom_call.1} parent=1 // pred_check
      _
    $region71: #{tpu_custom_call.1} parent=1 // pred_check_branch
      %1124 = sbr.rel (0) target = $region73
    $region72: #{tpu_custom_call.1} parent=1 // pred_region
      _
    $region73: #{tpu_custom_call.1} parent=1 // pred_fallthru
      _
    %1125 = vsyncpa [#allocation3], 1
    %1126 = vsyncpa [#allocation6], 1
    %1127 = vsyncpa [#allocation4], 1

</llo_original>
